<compile_context>
chip_gen: v6e
topology: v6e:2x2x1
jax: 0.10.0
libtpu: 0.0.40
codegen_flags: <defaults>
</compile_context>

<pallas_src>
import functools

import jax
import jax.numpy as jnp
from jax.experimental import pallas as pl
from jax.experimental.pallas import tpu as pltpu


_TARGET_BLOCK_BYTES = 4 << 20      # ~4 MiB per block
_MAX_LANE = 8192                   # cap on the lane (last-dim) width
_VMEM_LIMIT_BYTES = 32 << 20       # safe on v5e/v6e/v7x; 4 x 4 MiB buffers fit


def _swish_kernel(beta_ref, x_ref, o_ref, *, approx):
    beta = beta_ref[0]                       # f32 scalar from SMEM
    x = x_ref[...].astype(jnp.float32)
    denom = 1.0 + jnp.exp(-beta * x)         # exp -> EUP
    y = x * pl.reciprocal(denom, approx=approx)  # recip -> EUP
    o_ref[...] = y.astype(o_ref.dtype)


def _sublane_multiple(dtype) -> int:
    # 8 rows for 4-byte dtypes, 16 for 2-byte, 32 for 1-byte (packed vregs).
    itemsize = jnp.dtype(dtype).itemsize
    return max(8, 32 // itemsize)


def _swish_lane_dense(x, beta_arr):
    """Swish on an array whose element count is a multiple of 128."""
    dtype = x.dtype
    n = x.size
    itemsize = jnp.dtype(dtype).itemsize
    s = _sublane_multiple(dtype)

    # Largest multiple of 128 that divides n exactly (<= _MAX_LANE),
    # preferring a choice that leaves at least `s` rows (full sublanes).
    max_lane = min(_MAX_LANE, n)
    lane_c = 128
    for require_full_sublanes in (True, False):
        found = None
        for cand in range(max_lane, 127, -128):
            if n % cand == 0 and (not require_full_sublanes or n // cand >= s):
                found = cand
                break
        if found is not None:
            lane_c = found
            break
    rows = n // lane_c
    x2 = x.reshape(rows, lane_c)

    # Block rows from the lane-padded VMEM footprint (~4 MiB target).
    padded_lane = ((lane_c + 127) // 128) * 128
    bytes_per_sublane_group = padded_lane * itemsize * s
    rows_target = max(s, (_TARGET_BLOCK_BYTES // bytes_per_sublane_group) * s)
    rows_ceil = ((rows + s - 1) // s) * s
    block_rows = min(rows_target, rows_ceil)

    num_blocks = pl.cdiv(rows, block_rows)
    # Ensure >= 2 grid steps when possible so the "parallel" axis can shard
    # across both TensorCores on v7x.
    if num_blocks < 2 and rows_ceil >= 2 * s:
        block_rows = ((rows_ceil // 2 + s - 1) // s) * s
        num_blocks = pl.cdiv(rows, block_rows)

    approx = itemsize < 4  # approx EUP recip only where output precision allows

    out2 = pl.pallas_call(
        functools.partial(_swish_kernel, approx=approx),
        out_shape=jax.ShapeDtypeStruct((rows, lane_c), dtype),
        grid_spec=pltpu.PrefetchScalarGridSpec(
            num_scalar_prefetch=0,
            grid=(num_blocks,),
            in_specs=[
                pl.BlockSpec(memory_space=pltpu.MemorySpace.SMEM),   # beta
                pl.BlockSpec((block_rows, lane_c), lambda i: (i, 0)),
            ],
            out_specs=pl.BlockSpec((block_rows, lane_c), lambda i: (i, 0)),
        ),
        compiler_params=pltpu.CompilerParams(
            dimension_semantics=("parallel",),
            vmem_limit_bytes=_VMEM_LIMIT_BYTES,
        ),
    )(beta_arr, x2)
    return out2.reshape(x.shape)


def swish(x, beta=1.0):
    """Applies Swish(x) = x * sigmoid(beta * x) elementwise via a Pallas kernel."""
    orig_shape = x.shape
    dtype = x.dtype
    n = x.size
    if n == 0:
        return x

    beta_arr = jnp.asarray([beta], dtype=jnp.float32)

    rem = n % 128
    if rem == 0:
        return _swish_lane_dense(x, beta_arr).reshape(orig_shape)

    # Ragged element count: lane-dense kernel on the 128-aligned bulk; the
    # sub-128-element tail is computed directly.
    # TODO(synk): the <128-element tail bypasses the Pallas kernel (plain jnp).
    flat = x.reshape(-1)
    bulk_n = n - rem
    tail = flat[bulk_n:].astype(jnp.float32)
    bf = beta_arr[0]
    tail_out = (tail * jax.nn.sigmoid(bf * tail)).astype(dtype)
    if bulk_n == 0:
        return tail_out.reshape(orig_shape)
    bulk_out = _swish_lane_dense(flat[:bulk_n], beta_arr)
    return jnp.concatenate([bulk_out, tail_out]).reshape(orig_shape)


if __name__ == "__main__":
    key = jax.random.PRNGKey(0)
    beta = 1.0

    # Shape from the module's docstring example.
    x = jax.random.normal(key, (8, 40, 120), dtype=jnp.float32)
    out = jax.block_until_ready(swish(x, beta=beta))
    ref = x * jax.nn.sigmoid(beta * x)
    assert out.shape == x.shape and out.dtype == x.dtype
    assert jnp.max(jnp.abs(out - ref)) < 1e-5

    # bf16 path (approx EUP reciprocal; f32 internal math).
    xb = x.astype(jnp.bfloat16)
    outb = jax.block_until_ready(swish(xb, beta=beta))
    refb = (xb.astype(jnp.float32) * jax.nn.sigmoid(beta * xb.astype(jnp.float32))
            ).astype(jnp.bfloat16)
    assert outb.shape == xb.shape and outb.dtype == xb.dtype
    assert jnp.max(jnp.abs(outb.astype(jnp.float32) - refb.astype(jnp.float32))) < 5e-2

    # Element count not a multiple of 128 (bulk + tail path).
    x_odd = jax.random.normal(jax.random.PRNGKey(1), (2, 4, 17, 7), dtype=jnp.float32)
    out_odd = jax.block_until_ready(swish(x_odd, beta=0.75))
    ref_odd = x_odd * jax.nn.sigmoid(0.75 * x_odd)
    assert out_odd.shape == x_odd.shape
    assert jnp.max(jnp.abs(out_odd - ref_odd)) < 1e-5

    # 1-D odd-size input (regression test for the old 1-D fallback).
    x1d = jax.random.normal(jax.random.PRNGKey(2), (1000,), dtype=jnp.float32)
    out1d = jax.block_until_ready(swish(x1d, beta=beta))
    ref1d = x1d * jax.nn.sigmoid(beta * x1d)
    assert jnp.max(jnp.abs(out1d - ref1d)) < 1e-5

    print("KERNEL_OK")
</pallas_src>

<mosaic_0001>
module attributes {stable_mosaic.version = 11 : i64} {
  func.func @_swish_kernel(%arg0: i32, %arg1: memref<1xf32, #tpu.memory_space<smem>>, %arg2: memref<8x3840xf32, #tpu.memory_space<vmem>>, %arg3: memref<8x3840xf32, #tpu.memory_space<vmem>>) attributes {dimension_semantics = [#tpu.dimension_semantics<parallel>], iteration_bounds = array<i64: 2>, scalar_prefetch = 0 : i64, scratch_operands = 0 : i64, tpu.core_type = #tpu.core_type<tc>, window_params = [{transform_indices = @transform_0, window_bounds = array<i64: 1>}, {transform_indices = @transform_1, window_bounds = array<i64: 8, 3840>}, {transform_indices = @transform_2, window_bounds = array<i64: 8, 3840>}]} {
    %c0 = arith.constant 0 : index
    %0 = memref.load %arg1[%c0] : memref<1xf32, #tpu.memory_space<smem>>
    %c0_0 = arith.constant 0 : index
    %c0_1 = arith.constant 0 : index
    %1 = vector.load %arg2[%c0_0, %c0_1] : memref<8x3840xf32, #tpu.memory_space<vmem>>, vector<8x3840xf32>
    %cst = arith.constant 0.000000e+00 : f32
    %2 = arith.subf %cst, %0 : f32
    %3 = vector.broadcast %2 : f32 to vector<8x3840xf32>
    %4 = arith.mulf %3, %1 : vector<8x3840xf32>
    %5 = math.exp %4 : vector<8x3840xf32>
    %cst_2 = arith.constant 1.000000e+00 : f32
    %6 = vector.broadcast %cst_2 : f32 to vector<8x3840xf32>
    %7 = arith.addf %6, %5 : vector<8x3840xf32>
    %8 = tpu.reciprocal %7 : vector<8x3840xf32> -> vector<8x3840xf32>
    %9 = arith.mulf %1, %8 : vector<8x3840xf32>
    %c0_3 = arith.constant 0 : index
    %c0_4 = arith.constant 0 : index
    %10 = vector.load %arg3[%c0_3, %c0_4] : memref<8x3840xf32, #tpu.memory_space<vmem>>, vector<8x3840xf32>
    tpu.vector_store %arg3[%c0_3, %c0_4], %9 {strides = array<i32>} : memref<8x3840xf32, #tpu.memory_space<vmem>>, vector<8x3840xf32>,
    return
  }
  func.func @transform_0(%arg0: i32) -> i32 {
    %c0_i32 = arith.constant 0 : i32
    %c0_i32_0 = arith.constant 0 : i32
    return %c0_i32 : i32
  }
  func.func @transform_1(%arg0: i32) -> (i32, i32) {
    %c0_i32 = arith.constant 0 : i32
    %c0_i32_0 = arith.constant 0 : i32
    return %arg0, %c0_i32 : i32, i32
  }
  func.func @transform_2(%arg0: i32) -> (i32, i32) {
    %c0_i32 = arith.constant 0 : i32
    %c0_i32_0 = arith.constant 0 : i32
    return %arg0, %c0_i32 : i32, i32
  }
}

</mosaic_0001>

<llo_original>
// kernel: tpu_custom_call.1
$region0: #{tpu_custom_call.1}
  #allocation0 [shape = 'u32[]', space=smem, size = 0x4, offset = 0x4, fixed_abs, tag = 'smem constant byte address 0x4 - core index']
  #allocation1 [shape = 'u32[144,128]{1,0:T(1,128)}', space=vmem, size = 0x12000, scoped, tag = 'internal scratch']
  #allocation2 [shape = 'f32[1]{0:T(128)S(6)}', space=smem, size = 0x200, scoped, tag = 'scoped memory for tpu_custom_call.1']
  %s0 = inlined_call_operand.<no memory space> [shape: f32[1], index: 0, kind: input, shape index: {}]
  %s1 = inlined_call_operand.hbm [shape: f32[10,3840], index: 1, kind: input, shape index: {}]
  %s2 = inlined_call_operand.hbm [shape: f32[10,3840], index: 2, kind: output, shape index: {}]
  %s3 = sld [smem:[#allocation0]]
  $region45: #{tpu_custom_call.1} parent=0
    _
  %s5 = ssub.s32 1, %s3
  %s6 = scalar_select 0, %s5, %s3
  %7 = sst [smem:[#allocation2]] %s0
  $region1: #{tpu_custom_call.1} parent=0
    #allocation3 [shape = 'u8[245760]{0}', space=vmem, size = 0x3c000, scoped, tag = 'input window, operand 1']
    #allocation4 [shape = 's32[2]{0}', space=sflag, size = 0x8, scoped, tag = 'scoped memory for tpu_custom_call.1']
    #allocation5 [shape = 's32[2]{0}', space=sflag, size = 0x8, scoped, tag = 'scoped memory for tpu_custom_call.1']
    #allocation6 [shape = 'u8[245760]{0}', space=vmem, size = 0x3c000, scoped, tag = 'output window, operand 0']
    %8 = vsyncpa [#allocation4], 0
    %s9 = scalar_lea.sflag [#allocation4], 1
    %10 = vsyncpa %s9, 0
    %11 = vsyncpa [#allocation5], 0
    %s12 = scalar_lea.sflag [#allocation5], 1
    %13 = vsyncpa %s12, 0
    loop: start=0, step=1, limit=4
    $region2: #{tpu_custom_call.1} parent=1 // loop_pre_header
      _
    $region3: #{tpu_custom_call.1} parent=1 // loop_header
      %s15 = sphi 0, %s19
      %p16 = scmp.ge.s32.totalorder %s15, 4
      %s23 = sphi 0, %s23
      %s25 = sphi 0, %s23
      %s26 = sphi 0, %s25
      %s40 = sphi 0, %s26
      %s46 = sphi 0, %s48
      %s49 = sphi 0, %s46
      %s50 = sphi 0, %s49
      %s66 = sphi 0, %s50
      %s72 = sphi 0, %s74
      %s75 = sphi 0, %s72
      %s76 = sphi 0, %s75
      %s92 = sphi 0, %s76
    $region4: #{tpu_custom_call.1} parent=1 // loop_header_branch
      %18 = sbr.rel (%p16) target = $region8
    $region5: #{tpu_custom_call.1} parent=1 // loop_body
      %s20 = ssub.s32 %s15, 1
      %s21 = ssub.s32 %s15, 2
      %s22 = sadd.s32 %s15, 1
      %s24 = sadd.s32 %s23, 1
      %p27 = scmp.eq.s32.totalorder %s15, 1
      %p28 = scmp.ne.s32.totalorder %s23, %s25
      %p29 = scmp.eq.s32.totalorder %s15, 0
      %p30 = por %p28, %p29
      %p31 = scmp.ne.s32.totalorder %s23, %s25
      %p32 = scmp.eq.s32.totalorder %s20, 1
      %p33 = por %p31, %p32
      %p34 = scmp.ne.s32.totalorder %s25, %s26
      %p35 = scmp.eq.s32.totalorder %s20, 0
      %p36 = por %p34, %p35
      %p37 = scmp.ne.s32.totalorder %s25, %s26
      %p38 = scmp.eq.s32.totalorder %s21, 1
      %p39 = por %p37, %p38
      %p41 = scmp.ne.s32.totalorder %s26, %s40
      %p42 = scmp.eq.s32.totalorder %s21, 0
      %p43 = por %p41, %p42
      %s44 = ssub.s32 %s15, %s22
      %p45 = scmp.eq.s32.totalorder %s44, 0
      %s47 = sadd.s32 %s46, 1
      %s48 = scalar_select %p45, %s46, %s47
      %p51 = pneg %p45
      %p52 = scmp.eq.s32.totalorder %s15, 1
      %p53 = por %p51, %p52
      %p54 = scmp.ne.s32.totalorder %s46, %s49
      %p55 = scmp.eq.s32.totalorder %s15, 0
      %p56 = por %p54, %p55
      %p57 = scmp.ne.s32.totalorder %s46, %s49
      %p58 = scmp.eq.s32.totalorder %s20, 1
      %p59 = por %p57, %p58
      %p60 = scmp.ne.s32.totalorder %s49, %s50
      %p61 = scmp.eq.s32.totalorder %s20, 0
      %p62 = por %p60, %p61
      %p63 = scmp.ne.s32.totalorder %s49, %s50
      %p64 = scmp.eq.s32.totalorder %s21, 1
      %p65 = por %p63, %p64
      %p67 = scmp.ne.s32.totalorder %s50, %s66
      %p68 = scmp.eq.s32.totalorder %s21, 0
      %p69 = por %p67, %p68
      %s70 = ssub.s32 %s15, %s22
      %p71 = scmp.eq.s32.totalorder %s70, 0
      %s73 = sadd.s32 %s72, 1
      %s74 = scalar_select %p71, %s72, %s73
      %p77 = pneg %p71
      %p78 = scmp.eq.s32.totalorder %s15, 1
      %p79 = por %p77, %p78
      %p80 = scmp.ne.s32.totalorder %s72, %s75
      %p81 = scmp.eq.s32.totalorder %s15, 0
      %p82 = por %p80, %p81
      %p83 = scmp.ne.s32.totalorder %s72, %s75
      %p84 = scmp.eq.s32.totalorder %s20, 1
      %p85 = por %p83, %p84
      %p86 = scmp.ne.s32.totalorder %s75, %s76
      %p87 = scmp.eq.s32.totalorder %s20, 0
      %p88 = por %p86, %p87
      %p89 = scmp.ne.s32.totalorder %s75, %s76
      %p90 = scmp.eq.s32.totalorder %s21, 1
      %p91 = por %p89, %p90
      %p93 = scmp.ne.s32.totalorder %s76, %s92
      %p94 = scmp.eq.s32.totalorder %s21, 0
      %p95 = por %p93, %p94
      %p96 = scmp.le.s32.totalorder 1, %s15
      %p97 = scmp.lt.s32.totalorder %s15, 3
      %p98 = pnand %p96, %p97
      %p99 = pneg %p98
      // Predicated region
      $region9: #{tpu_custom_call.1} parent=5 // pred_check
        _
      $region10: #{tpu_custom_call.1} parent=5 // pred_check_branch
        %101 = sbr.rel (%p98) target = $region12
      $region11: #{tpu_custom_call.1} parent=5 // pred_region
        %s102 = ssub.s32 %s15, 1
        // Predicated region
        $region13: #{tpu_custom_call.1} parent=11 // pred_check
          %p103 = pneg %p36
        $region14: #{tpu_custom_call.1} parent=11 // pred_check_branch
          %105 = sbr.rel (%p103) target = $region16
        $region15: #{tpu_custom_call.1} parent=11 // pred_region
          _
        $region16: #{tpu_custom_call.1} parent=11 // pred_fallthru
          _
      $region12: #{tpu_custom_call.1} parent=5 // pred_fallthru
        _
      %p106 = scmp.lt.s32.totalorder %s15, 2
      // Predicated region
      $region17: #{tpu_custom_call.1} parent=5 // pred_check
        %p107 = pneg %p106
      $region18: #{tpu_custom_call.1} parent=5 // pred_check_branch
        %109 = sbr.rel (%p107) target = $region20
      $region19: #{tpu_custom_call.1} parent=5 // pred_region
        // Predicated region
        $region21: #{tpu_custom_call.1} parent=19 // pred_check
          %p110 = pneg %p56
        $region22: #{tpu_custom_call.1} parent=19 // pred_check_branch
          %112 = sbr.rel (%p110) target = $region24
        $region23: #{tpu_custom_call.1} parent=19 // pred_region
          %s113 = sand.u32 %s46, 1
          %s114 = scalar_lea.sflag [#allocation4], %s113
          %s115 = sand.u32 %s46, 1
          %s116 = smul.addr %s115, 240
          %s117 = scalar_lea.vmem [#allocation3], %s116
          %s119 = ssub.s32 3840, 3840
          %120 = vsyncadd %s114, %s119
          %s121 = smul.addr %s15, 30
          %s122 = smul.addr %s121, 128
          %s123 = scalar_lea.hbm %s1, %s122
          %s125 = sshll.u32 %s117, 4
          %s126 = int_to_ptr.vmem [resolvable:$true] %s125
          %128 = dma.hbm_to_vmem [thread:$0]  %s123, 3840, %s126, %s114
        $region24: #{tpu_custom_call.1} parent=19 // pred_fallthru
          _
      $region20: #{tpu_custom_call.1} parent=5 // pred_fallthru
        _
      %p129 = scmp.le.s32.totalorder 1, %s15
      %p130 = scmp.lt.s32.totalorder %s15, 3
      %p131 = pnand %p129, %p130
      %p132 = pneg %p131
      // Predicated region
      $region25: #{tpu_custom_call.1} parent=5 // pred_check
        _
      $region26: #{tpu_custom_call.1} parent=5 // pred_check_branch
        %134 = sbr.rel (%p131) target = $region28
      $region27: #{tpu_custom_call.1} parent=5 // pred_region
        %s135 = ssub.s32 %s15, 1
        %s136 = sand.u32 %s49, 1
        %s137 = scalar_lea.sflag [#allocation4], %s136
        %s138 = sand.u32 %s49, 1
        %s139 = smul.addr %s138, 240
        %s140 = scalar_lea.vmem [#allocation3], %s139
        // Predicated region
        $region29: #{tpu_custom_call.1} parent=27 // pred_check
          %p141 = pneg %p62
        $region30: #{tpu_custom_call.1} parent=27 // pred_check_branch
          %143 = sbr.rel (%p141) target = $region32
        $region31: #{tpu_custom_call.1} parent=27 // pred_region
          %144 = dma.done %s137, 3840
        $region32: #{tpu_custom_call.1} parent=27 // pred_fallthru
          _
        %p145 = pneg %p36
        %p146 = pneg %p33
        %s147 = sand.u32 %s49, 1
        %s148 = scalar_lea.sflag [#allocation4], %s147
        %s149 = sand.u32 %s49, 1
        %s150 = smul.addr %s149, 240
        %s151 = scalar_lea.vmem [#allocation3], %s150
        %p152 = pneg %p62
        %p153 = pneg %p59
        %p154 = pneg %p88
        %p155 = pneg %p85
        %s156 = sand.u32 %s75, 1
        %s157 = scalar_lea.sflag [#allocation5], %s156
        %s158 = sand.u32 %s75, 1
        %s159 = smul.addr %s158, 240
        %s160 = scalar_lea.vmem [#allocation6], %s159
        %s161 = sld [smem:[#allocation2]]
        %v162 = vld [vmem:[%s140] sm:$0xff]
        %v163 = vld [vmem:[%s140 + $0x8] sm:$0xff]
        %v164 = vld [vmem:[%s140 + $0x10] sm:$0xff]
        %v165 = vld [vmem:[%s140 + $0x18] sm:$0xff]
        %v166 = vld [vmem:[%s140 + $0x20] sm:$0xff]
        %v167 = vld [vmem:[%s140 + $0x28] sm:$0xff]
        %v168 = vld [vmem:[%s140 + $0x30] sm:$0xff]
        %v169 = vld [vmem:[%s140 + $0x38] sm:$0xff]
        %v170 = vld [vmem:[%s140 + $0x40] sm:$0xff]
        %v171 = vld [vmem:[%s140 + $0x48] sm:$0xff]
        %v172 = vld [vmem:[%s140 + $0x50] sm:$0xff]
        %v173 = vld [vmem:[%s140 + $0x58] sm:$0xff]
        %v174 = vld [vmem:[%s140 + $0x60] sm:$0xff]
        %v175 = vld [vmem:[%s140 + $0x68] sm:$0xff]
        %v176 = vld [vmem:[%s140 + $0x70] sm:$0xff]
        %v177 = vld [vmem:[%s140 + $0x78] sm:$0xff]
        %v178 = vld [vmem:[%s140 + $0x80] sm:$0xff]
        %v179 = vld [vmem:[%s140 + $0x88] sm:$0xff]
        %v180 = vld [vmem:[%s140 + $0x90] sm:$0xff]
        %v181 = vld [vmem:[%s140 + $0x98] sm:$0xff]
        %v182 = vld [vmem:[%s140 + $0xa0] sm:$0xff]
        %v183 = vld [vmem:[%s140 + $0xa8] sm:$0xff]
        %v184 = vld [vmem:[%s140 + $0xb0] sm:$0xff]
        %v185 = vld [vmem:[%s140 + $0xb8] sm:$0xff]
        %v186 = vld [vmem:[%s140 + $0xc0] sm:$0xff]
        %v187 = vld [vmem:[%s140 + $0xc8] sm:$0xff]
        %v188 = vld [vmem:[%s140 + $0xd0] sm:$0xff]
        %v189 = vld [vmem:[%s140 + $0xd8] sm:$0xff]
        %v190 = vld [vmem:[%s140 + $0xe0] sm:$0xff]
        %v191 = vld [vmem:[%s140 + $0xe8] sm:$0xff]
        %s192 = ssub.f32 0.0, %s161
        %v193 = vstv %s192
        %v194 = vmul.f32 %v193, %v162
        %v195 = vmul.f32 %v193, %v163
        %v196 = vmul.f32 %v193, %v164
        %v197 = vmul.f32 %v193, %v165
        %v198 = vmul.f32 %v193, %v166
        %v199 = vmul.f32 %v193, %v167
        %v200 = vmul.f32 %v193, %v168
        %v201 = vmul.f32 %v193, %v169
        %v202 = vmul.f32 %v193, %v170
        %v203 = vmul.f32 %v193, %v171
        %v204 = vmul.f32 %v193, %v172
        %v205 = vmul.f32 %v193, %v173
        %v206 = vmul.f32 %v193, %v174
        %v207 = vmul.f32 %v193, %v175
        %v208 = vmul.f32 %v193, %v176
        %v209 = vmul.f32 %v193, %v177
        %v210 = vmul.f32 %v193, %v178
        %v211 = vmul.f32 %v193, %v179
        %v212 = vmul.f32 %v193, %v180
        %v213 = vmul.f32 %v193, %v181
        %v214 = vmul.f32 %v193, %v182
        %v215 = vmul.f32 %v193, %v183
        %v216 = vmul.f32 %v193, %v184
        %v217 = vmul.f32 %v193, %v185
        %v218 = vmul.f32 %v193, %v186
        %v219 = vmul.f32 %v193, %v187
        %v220 = vmul.f32 %v193, %v188
        %v221 = vmul.f32 %v193, %v189
        %v222 = vmul.f32 %v193, %v190
        %v223 = vmul.f32 %v193, %v191
        %v224 = vmul.f32 %v194, 1.442695
        %v225 = vpow.pop %v224
        %v226 = vmul.f32 %v195, 1.442695
        %v227 = vpow.pop %v226
        %v228 = vmul.f32 %v196, 1.442695
        %v229 = vpow.pop %v228
        %v230 = vmul.f32 %v197, 1.442695
        %v231 = vpow.pop %v230
        %v232 = vmul.f32 %v198, 1.442695
        %v233 = vpow.pop %v232
        %v234 = vmul.f32 %v199, 1.442695
        %v235 = vpow.pop %v234
        %v236 = vmul.f32 %v200, 1.442695
        %v237 = vpow.pop %v236
        %v238 = vmul.f32 %v201, 1.442695
        %v239 = vpow.pop %v238
        %v240 = vmul.f32 %v202, 1.442695
        %v241 = vpow.pop %v240
        %v242 = vmul.f32 %v203, 1.442695
        %v243 = vpow.pop %v242
        %v244 = vmul.f32 %v204, 1.442695
        %v245 = vpow.pop %v244
        %v246 = vmul.f32 %v205, 1.442695
        %v247 = vpow.pop %v246
        %v248 = vmul.f32 %v206, 1.442695
        %v249 = vpow.pop %v248
        %v250 = vmul.f32 %v207, 1.442695
        %v251 = vpow.pop %v250
        %v252 = vmul.f32 %v208, 1.442695
        %v253 = vpow.pop %v252
        %v254 = vmul.f32 %v209, 1.442695
        %v255 = vpow.pop %v254
        %v256 = vmul.f32 %v210, 1.442695
        %v257 = vpow.pop %v256
        %v258 = vmul.f32 %v211, 1.442695
        %v259 = vpow.pop %v258
        %v260 = vmul.f32 %v212, 1.442695
        %v261 = vpow.pop %v260
        %v262 = vmul.f32 %v213, 1.442695
        %v263 = vpow.pop %v262
        %v264 = vmul.f32 %v214, 1.442695
        %v265 = vpow.pop %v264
        %v266 = vmul.f32 %v215, 1.442695
        %v267 = vpow.pop %v266
        %v268 = vmul.f32 %v216, 1.442695
        %v269 = vpow.pop %v268
        %v270 = vmul.f32 %v217, 1.442695
        %v271 = vpow.pop %v270
        %v272 = vmul.f32 %v218, 1.442695
        %v273 = vpow.pop %v272
        %v274 = vmul.f32 %v219, 1.442695
        %v275 = vpow.pop %v274
        %v276 = vmul.f32 %v220, 1.442695
        %v277 = vpow.pop %v276
        %v278 = vmul.f32 %v221, 1.442695
        %v279 = vpow.pop %v278
        %v280 = vmul.f32 %v222, 1.442695
        %v281 = vpow.pop %v280
        %v282 = vmul.f32 %v223, 1.442695
        %v283 = vpow.pop %v282
        %v284 = vadd.f32 %v225, 1.0
        %v285 = vadd.f32 %v227, 1.0
        %v286 = vadd.f32 %v229, 1.0
        %v287 = vadd.f32 %v231, 1.0
        %v288 = vadd.f32 %v233, 1.0
        %v289 = vadd.f32 %v235, 1.0
        %v290 = vadd.f32 %v237, 1.0
        %v291 = vadd.f32 %v239, 1.0
        %v292 = vadd.f32 %v241, 1.0
        %v293 = vadd.f32 %v243, 1.0
        %v294 = vadd.f32 %v245, 1.0
        %v295 = vadd.f32 %v247, 1.0
        %v296 = vadd.f32 %v249, 1.0
        %v297 = vadd.f32 %v251, 1.0
        %v298 = vadd.f32 %v253, 1.0
        %v299 = vadd.f32 %v255, 1.0
        %v300 = vadd.f32 %v257, 1.0
        %v301 = vadd.f32 %v259, 1.0
        %v302 = vadd.f32 %v261, 1.0
        %v303 = vadd.f32 %v263, 1.0
        %v304 = vadd.f32 %v265, 1.0
        %v305 = vadd.f32 %v267, 1.0
        %v306 = vadd.f32 %v269, 1.0
        %v307 = vadd.f32 %v271, 1.0
        %v308 = vadd.f32 %v273, 1.0
        %v309 = vadd.f32 %v275, 1.0
        %v310 = vadd.f32 %v277, 1.0
        %v311 = vadd.f32 %v279, 1.0
        %v312 = vadd.f32 %v281, 1.0
        %v313 = vadd.f32 %v283, 1.0
        %v314 = vrcp.pop %v284
        %v315 = vrcp.pop %v285
        %v316 = vrcp.pop %v286
        %v317 = vrcp.pop %v287
        %v318 = vrcp.pop %v288
        %v319 = vrcp.pop %v289
        %v320 = vrcp.pop %v290
        %v321 = vrcp.pop %v291
        %v322 = vrcp.pop %v292
        %v323 = vrcp.pop %v293
        %v324 = vrcp.pop %v294
        %v325 = vrcp.pop %v295
        %v326 = vrcp.pop %v296
        %v327 = vrcp.pop %v297
        %v328 = vrcp.pop %v298
        %v329 = vrcp.pop %v299
        %v330 = vrcp.pop %v300
        %v331 = vrcp.pop %v301
        %v332 = vrcp.pop %v302
        %v333 = vrcp.pop %v303
        %v334 = vrcp.pop %v304
        %v335 = vrcp.pop %v305
        %v336 = vrcp.pop %v306
        %v337 = vrcp.pop %v307
        %v338 = vrcp.pop %v308
        %v339 = vrcp.pop %v309
        %v340 = vrcp.pop %v310
        %v341 = vrcp.pop %v311
        %v342 = vrcp.pop %v312
        %v343 = vrcp.pop %v313
        %v344 = vmul.f32 %v162, %v314
        %v345 = vmul.f32 %v163, %v315
        %v346 = vmul.f32 %v164, %v316
        %v347 = vmul.f32 %v165, %v317
        %v348 = vmul.f32 %v166, %v318
        %v349 = vmul.f32 %v167, %v319
        %v350 = vmul.f32 %v168, %v320
        %v351 = vmul.f32 %v169, %v321
        %v352 = vmul.f32 %v170, %v322
        %v353 = vmul.f32 %v171, %v323
        %v354 = vmul.f32 %v172, %v324
        %v355 = vmul.f32 %v173, %v325
        %v356 = vmul.f32 %v174, %v326
        %v357 = vmul.f32 %v175, %v327
        %v358 = vmul.f32 %v176, %v328
        %v359 = vmul.f32 %v177, %v329
        %v360 = vmul.f32 %v178, %v330
        %v361 = vmul.f32 %v179, %v331
        %v362 = vmul.f32 %v180, %v332
        %v363 = vmul.f32 %v181, %v333
        %v364 = vmul.f32 %v182, %v334
        %v365 = vmul.f32 %v183, %v335
        %v366 = vmul.f32 %v184, %v336
        %v367 = vmul.f32 %v185, %v337
        %v368 = vmul.f32 %v186, %v338
        %v369 = vmul.f32 %v187, %v339
        %v370 = vmul.f32 %v188, %v340
        %v371 = vmul.f32 %v189, %v341
        %v372 = vmul.f32 %v190, %v342
        %v373 = vmul.f32 %v191, %v343
        %374 = vst [vmem:[%s160] sm:$0xff] %v344
        %375 = vst [vmem:[%s160 + $0x8] sm:$0xff] %v345
        %376 = vst [vmem:[%s160 + $0x10] sm:$0xff] %v346
        %377 = vst [vmem:[%s160 + $0x18] sm:$0xff] %v347
        %378 = vst [vmem:[%s160 + $0x20] sm:$0xff] %v348
        %379 = vst [vmem:[%s160 + $0x28] sm:$0xff] %v349
        %380 = vst [vmem:[%s160 + $0x30] sm:$0xff] %v350
        %381 = vst [vmem:[%s160 + $0x38] sm:$0xff] %v351
        %382 = vst [vmem:[%s160 + $0x40] sm:$0xff] %v352
        %383 = vst [vmem:[%s160 + $0x48] sm:$0xff] %v353
        %384 = vst [vmem:[%s160 + $0x50] sm:$0xff] %v354
        %385 = vst [vmem:[%s160 + $0x58] sm:$0xff] %v355
        %386 = vst [vmem:[%s160 + $0x60] sm:$0xff] %v356
        %387 = vst [vmem:[%s160 + $0x68] sm:$0xff] %v357
        %388 = vst [vmem:[%s160 + $0x70] sm:$0xff] %v358
        %389 = vst [vmem:[%s160 + $0x78] sm:$0xff] %v359
        %390 = vst [vmem:[%s160 + $0x80] sm:$0xff] %v360
        %391 = vst [vmem:[%s160 + $0x88] sm:$0xff] %v361
        %392 = vst [vmem:[%s160 + $0x90] sm:$0xff] %v362
        %393 = vst [vmem:[%s160 + $0x98] sm:$0xff] %v363
        %394 = vst [vmem:[%s160 + $0xa0] sm:$0xff] %v364
        %395 = vst [vmem:[%s160 + $0xa8] sm:$0xff] %v365
        %396 = vst [vmem:[%s160 + $0xb0] sm:$0xff] %v366
        %397 = vst [vmem:[%s160 + $0xb8] sm:$0xff] %v367
        %398 = vst [vmem:[%s160 + $0xc0] sm:$0xff] %v368
        %399 = vst [vmem:[%s160 + $0xc8] sm:$0xff] %v369
        %400 = vst [vmem:[%s160 + $0xd0] sm:$0xff] %v370
        %401 = vst [vmem:[%s160 + $0xd8] sm:$0xff] %v371
        %402 = vst [vmem:[%s160 + $0xe0] sm:$0xff] %v372
        %403 = vst [vmem:[%s160 + $0xe8] sm:$0xff] %v373
        %s404 = sand.u32 %s75, 1
        %s405 = scalar_lea.sflag [#allocation5], %s404
        %s406 = sand.u32 %s75, 1
        %s407 = smul.addr %s406, 240
        %s408 = scalar_lea.vmem [#allocation6], %s407
        // Predicated region
        $region33: #{tpu_custom_call.1} parent=27 // pred_check
          %p409 = pneg %p85
        $region34: #{tpu_custom_call.1} parent=27 // pred_check_branch
          %411 = sbr.rel (%p409) target = $region36
        $region35: #{tpu_custom_call.1} parent=27 // pred_region
          %s413 = ssub.s32 3840, 3840
          %414 = vsyncadd %s405, %s413
          %s415 = smul.addr %s20, 30
          %s416 = smul.addr %s415, 128
          %s417 = scalar_lea.hbm %s2, %s416
          %s419 = sshll.u32 %s408, 4
          %s420 = int_to_ptr.vmem [resolvable:$true] %s419
          %422 = dma.vmem_to_hbm [thread:$0]  %s420, 3840, %s417, %s405
        $region36: #{tpu_custom_call.1} parent=27 // pred_fallthru
          _
      $region28: #{tpu_custom_call.1} parent=5 // pred_fallthru
        _
      %p423 = scmp.le.s32.totalorder 2, %s15
      // Predicated region
      $region37: #{tpu_custom_call.1} parent=5 // pred_check
        %p424 = pneg %p423
      $region38: #{tpu_custom_call.1} parent=5 // pred_check_branch
        %426 = sbr.rel (%p424) target = $region40
      $region39: #{tpu_custom_call.1} parent=5 // pred_region
        %s427 = ssub.s32 %s15, 2
        // Predicated region
        $region41: #{tpu_custom_call.1} parent=39 // pred_check
          %p428 = pneg %p91
        $region42: #{tpu_custom_call.1} parent=39 // pred_check_branch
          %430 = sbr.rel (%p428) target = $region44
        $region43: #{tpu_custom_call.1} parent=39 // pred_region
          %s431 = sand.u32 %s76, 1
          %s432 = scalar_lea.sflag [#allocation5], %s431
          %s433 = sand.u32 %s76, 1
          %s434 = smul.addr %s433, 240
          %s435 = scalar_lea.vmem [#allocation6], %s434
          %436 = dma.done %s432, 3840
        $region44: #{tpu_custom_call.1} parent=39 // pred_fallthru
          _
      $region40: #{tpu_custom_call.1} parent=5 // pred_fallthru
        _
    $region6: #{tpu_custom_call.1} parent=1 // loop_footer
      %s19 = sadd.s32 1, %s15
    $region7: #{tpu_custom_call.1} parent=1 // loop_footer_branch
      %14 = sbr.rel target = $region3
    $region8: #{tpu_custom_call.1} parent=1 // loop_exit
      _
    %437 = vsyncpa [#allocation4], 1
    %s438 = scalar_lea.sflag [#allocation4], 1
    %439 = vsyncpa %s438, 1
    %440 = vsyncpa [#allocation5], 1
    %s441 = scalar_lea.sflag [#allocation5], 1
    %442 = vsyncpa %s441, 1

</llo_original>
